<compile_context>
chip_gen: v7x
topology: tpu7x:2x2x1
jax: 0.10.0
libtpu: 0.0.40
codegen_flags: <defaults>
</compile_context>

<pallas_src>
import functools

import jax
import jax.numpy as jnp
from jax import lax
from jax.experimental import pallas as pl
from jax.experimental.pallas import tpu as pltpu

ACTION_DIM = 2
STATE_DIM = 2 * 2 + 3 * 2 + 1  # 11
OUT_DIM = 2 * ACTION_DIM       # fused [mean | std] -> 4


def _linreg_kernel(w_ref, b_ref, x_ref, mean_ref, std_ref):
    # w: (4, 11), b: (4, 1), x: (11, tb), mean/std: (2, tb).  Batch on lanes.
    y = jnp.dot(w_ref[...], x_ref[...], preferred_element_type=jnp.float32)
    y = y + b_ref[...]                         # (4, 1) bias, lane-broadcast
    sig = jax.nn.sigmoid(y)                    # (4, tb), lane-dense

    # Compile-time per-row scale/offset (rows: mean0, mean1, std0, std1).
    row = lax.broadcasted_iota(jnp.int32, sig.shape, 0)
    scale = jnp.where(row == 0, 400.0 - 120.0,
            jnp.where(row == 1, 40.0,
            jnp.where(row == 2, 20.0, 10.0)))
    offset = jnp.where(row == 0, 120.0, 0.0)
    out = scale * sig + offset                 # (4, tb)

    mean_ref[...] = out[:ACTION_DIM, :]
    std_ref[...] = out[ACTION_DIM:, :]


def _choose_tile(batch, max_tile=32768, min_tile=1024, target_steps=4):
    """Batch tile on the lane axis: >=2 grid steps when the batch allows
    (v7x megacore + DMA/compute overlap), tile a multiple of 128 (or the full
    batch), large enough to amortize ~0.35us/step overhead, small enough to
    keep double-buffered VMEM inside every generation's scoped limit."""
    min_tile = max(128, min(min_tile, max_tile))
    if batch <= min_tile:
        return batch                               # single full-extent block
    tb = -(-batch // target_steps)                 # cdiv
    tb = ((tb + 127) // 128) * 128                 # lane multiple
    return max(min_tile, min(tb, max_tile))


def _fused_params(wm, bm, ws, bs):
    w_t = jnp.concatenate([wm, ws], axis=1).T.astype(jnp.float32)   # (4, 11)
    b_t = jnp.concatenate([bm, bs], axis=1).T.astype(jnp.float32)   # (4, 1)
    return w_t, b_t


def _forward_t(x_t, w_t, b_t, tb):
    batch = x_t.shape[1]
    num_tiles = pl.cdiv(batch, tb)
    out_shape = (jax.ShapeDtypeStruct((ACTION_DIM, batch), jnp.float32),
                 jax.ShapeDtypeStruct((ACTION_DIM, batch), jnp.float32))
    mean_t, std_t = pl.pallas_call(
        _linreg_kernel,
        out_shape=out_shape,
        grid=(num_tiles,),
        in_specs=[
            pl.BlockSpec((OUT_DIM, STATE_DIM), lambda i: (0, 0)),   # W_t, resident
            pl.BlockSpec((OUT_DIM, 1), lambda i: (0, 0)),           # bias, resident
            pl.BlockSpec((STATE_DIM, tb), lambda i: (0, i)),        # x_t, batch on lanes
        ],
        out_specs=(
            pl.BlockSpec((ACTION_DIM, tb), lambda i: (0, i)),
            pl.BlockSpec((ACTION_DIM, tb), lambda i: (0, i)),
        ),
        compiler_params=pltpu.CompilerParams(
            dimension_semantics=("parallel",),
        ),
    )(w_t, b_t, x_t)
    return mean_t, std_t


@functools.partial(jax.jit, static_argnames=("max_tile",))
def linear_regression_forward_t(x_t, wm, bm, ws, bs, *, max_tile=32768):
    """Feature-major (lane-dense) entry point.

    x_t: (STATE_DIM, B) f32; returns (mean_t, std_t), each (ACTION_DIM, B).
    No wrapper-side transposes or slices — outputs come straight from the kernel.
    """
    w_t, b_t = _fused_params(wm, bm, ws, bs)
    tb = _choose_tile(x_t.shape[1], max_tile)
    return _forward_t(x_t.astype(jnp.float32), w_t, b_t, tb)


@functools.partial(jax.jit, static_argnames=("max_tile",))
def linear_regression_forward(x, wm, bm, ws, bs, *, max_tile=32768):
    """Module-equivalent entry point (matches LinearRegression.forward).

    x: (B, STATE_DIM) f32; returns (mean, std), each (B, ACTION_DIM) f32.
    Does one wrapper transpose each way around the lane-dense kernel.
    """
    w_t, b_t = _fused_params(wm, bm, ws, bs)
    tb = _choose_tile(x.shape[0], max_tile)
    mean_t, std_t = _forward_t(x.astype(jnp.float32).T, w_t, b_t, tb)
    return mean_t.T, std_t.T


def init_params(key):
    """Deterministic init mimicking nn.Linear default (uniform +/- 1/sqrt(fan_in))."""
    k1, k2, k3, k4 = jax.random.split(key, 4)
    bound = 1.0 / jnp.sqrt(float(STATE_DIM))
    # Stored pre-transposed: (STATE_DIM, ACTION_DIM) == W.T of torch's (out, in).
    wm = jax.random.uniform(k1, (STATE_DIM, ACTION_DIM), jnp.float32, -bound, bound)
    bm = jax.random.uniform(k2, (1, ACTION_DIM), jnp.float32, -bound, bound)
    ws = jax.random.uniform(k3, (STATE_DIM, ACTION_DIM), jnp.float32, -bound, bound)
    bs = jax.random.uniform(k4, (1, ACTION_DIM), jnp.float32, -bound, bound)
    return wm, bm, ws, bs


def reference_forward(x, wm, bm, ws, bs):
    m = x @ wm + bm
    s = x @ ws + bs
    mean = jnp.array([280.0, 40.0]) * jax.nn.sigmoid(m) + jnp.array([120.0, 0.0])
    std = jnp.array([20.0, 10.0]) * jax.nn.sigmoid(s)
    return mean, std


if __name__ == "__main__":
    key = jax.random.PRNGKey(0)
    kx, kp = jax.random.split(key)

    wm, bm, ws, bs = init_params(kp)

    # Small smoke test (batch=8), module-equivalent batch-major API.
    x_small = jax.random.normal(kx, (8, STATE_DIM), dtype=jnp.float32)
    mean, std = linear_regression_forward(x_small, wm, bm, ws, bs)
    jax.block_until_ready((mean, std))
    ref_mean, ref_std = reference_forward(x_small, wm, bm, ws, bs)
    assert mean.shape == (8, ACTION_DIM) and std.shape == (8, ACTION_DIM)
    assert jnp.allclose(mean, ref_mean, atol=1e-4, rtol=1e-4), "mean mismatch"
    assert jnp.allclose(std, ref_std, atol=1e-4, rtol=1e-4), "std mismatch"

    # Non-multiple-of-tile batch via the feature-major entry point: exercises
    # grid > 1, the partial trailing block, and the lane-dense output path.
    x_big = jax.random.normal(kx, (1000, STATE_DIM), dtype=jnp.float32)
    mean_t, std_t = linear_regression_forward_t(x_big.T, wm, bm, ws, bs, max_tile=512)
    jax.block_until_ready((mean_t, std_t))
    ref_mean_b, ref_std_b = reference_forward(x_big, wm, bm, ws, bs)
    assert mean_t.shape == (ACTION_DIM, 1000) and std_t.shape == (ACTION_DIM, 1000)
    assert jnp.allclose(mean_t.T, ref_mean_b, atol=1e-4, rtol=1e-4), "mean mismatch (big)"
    assert jnp.allclose(std_t.T, ref_std_b, atol=1e-4, rtol=1e-4), "std mismatch (big)"

    print("KERNEL_OK")
</pallas_src>

<mosaic_0001>
module attributes {stable_mosaic.version = 11 : i64} {
  func.func @_linreg_kernel(%arg0: i32, %arg1: memref<4x11xf32, #tpu.memory_space<vmem>>, %arg2: memref<4x1xf32, #tpu.memory_space<vmem>>, %arg3: memref<11x8xf32, #tpu.memory_space<vmem>>, %arg4: memref<2x8xf32, #tpu.memory_space<vmem>>, %arg5: memref<2x8xf32, #tpu.memory_space<vmem>>) attributes {dimension_semantics = [#tpu.dimension_semantics<parallel>], iteration_bounds = array<i64: 1>, scalar_prefetch = 0 : i64, scratch_operands = 0 : i64, tpu.core_type = #tpu.core_type<tc>, window_params = [{pipeline_mode = #tpu.pipeline_mode<synchronous>, transform_indices = @transform_0, window_bounds = array<i64: 4, 11>}, {pipeline_mode = #tpu.pipeline_mode<synchronous>, transform_indices = @transform_1, window_bounds = array<i64: 4, 1>}, {transform_indices = @transform_2, window_bounds = array<i64: 11, 8>}, {transform_indices = @transform_3, window_bounds = array<i64: 2, 8>}, {transform_indices = @transform_4, window_bounds = array<i64: 2, 8>}]} {
    %c0 = arith.constant 0 : index
    %c0_0 = arith.constant 0 : index
    %0 = vector.load %arg1[%c0, %c0_0] : memref<4x11xf32, #tpu.memory_space<vmem>>, vector<4x11xf32>
    %c0_1 = arith.constant 0 : index
    %c0_2 = arith.constant 0 : index
    %1 = vector.load %arg3[%c0_1, %c0_2] : memref<11x8xf32, #tpu.memory_space<vmem>>, vector<11x8xf32>
    %cst = arith.constant dense<0.000000e+00> : vector<4x8xf32>
    %2 = tpu.matmul %0, %1, %cst {dimension_numbers = #tpu.dot_dimension_numbers<[1], [0], [0], [1], [0, 0, 1, 1], [], []>} : vector<4x11xf32>, vector<11x8xf32>, vector<4x8xf32> -> vector<4x8xf32>
    %c0_3 = arith.constant 0 : index
    %c0_4 = arith.constant 0 : index
    %3 = vector.load %arg2[%c0_3, %c0_4] : memref<4x1xf32, #tpu.memory_space<vmem>>, vector<4x1xf32>
    %4 = vector.broadcast %3 : vector<4x1xf32> to vector<4x8xf32>
    %5 = arith.addf %2, %4 : vector<4x8xf32>
    %6 = arith.negf %5 : vector<4x8xf32>
    %7 = math.exp %6 : vector<4x8xf32>
    %cst_5 = arith.constant 1.000000e+00 : f32
    %8 = vector.broadcast %cst_5 : f32 to vector<4x8xf32>
    %9 = arith.addf %8, %7 : vector<4x8xf32>
    %10 = arith.divf %8, %9 : vector<4x8xf32>
    %11 = tpu.iota {dimensions = array<i32: 0>} : vector<4x8xi32>
    %c0_i32 = arith.constant 0 : i32
    %12 = vector.broadcast %c0_i32 : i32 to vector<4x8xi32>
    %13 = arith.cmpi eq, %11, %12 : vector<4x8xi32>
    %c1_i32 = arith.constant 1 : i32
    %14 = vector.broadcast %c1_i32 : i32 to vector<4x8xi32>
    %15 = arith.cmpi eq, %11, %14 : vector<4x8xi32>
    %c2_i32 = arith.constant 2 : i32
    %16 = vector.broadcast %c2_i32 : i32 to vector<4x8xi32>
    %17 = arith.cmpi eq, %11, %16 : vector<4x8xi32>
    %cst_6 = arith.constant 2.000000e+01 : f32
    %cst_7 = arith.constant 1.000000e+01 : f32
    %18 = vector.broadcast %cst_6 : f32 to vector<4x8xf32>
    %19 = vector.broadcast %cst_7 : f32 to vector<4x8xf32>
    %20 = arith.select %17, %18, %19 : vector<4x8xi1>, vector<4x8xf32>
    %cst_8 = arith.constant 4.000000e+01 : f32
    %21 = vector.broadcast %cst_8 : f32 to vector<4x8xf32>
    %22 = arith.select %15, %21, %20 : vector<4x8xi1>, vector<4x8xf32>
    %cst_9 = arith.constant 2.800000e+02 : f32
    %23 = vector.broadcast %cst_9 : f32 to vector<4x8xf32>
    %24 = arith.select %13, %23, %22 : vector<4x8xi1>, vector<4x8xf32>
    %c0_i32_10 = arith.constant 0 : i32
    %25 = vector.broadcast %c0_i32_10 : i32 to vector<4x8xi32>
    %26 = arith.cmpi eq, %11, %25 : vector<4x8xi32>
    %cst_11 = arith.constant 1.200000e+02 : f32
    %cst_12 = arith.constant 0.000000e+00 : f32
    %27 = vector.broadcast %cst_11 : f32 to vector<4x8xf32>
    %28 = vector.broadcast %cst_12 : f32 to vector<4x8xf32>
    %29 = arith.select %26, %27, %28 : vector<4x8xi1>, vector<4x8xf32>
    %30 = arith.mulf %24, %10 : vector<4x8xf32>
    %31 = arith.addf %30, %29 : vector<4x8xf32>
    %32 = vector.extract_strided_slice %31 {offsets = [0, 0], sizes = [2, 8], strides = [1, 1]} : vector<4x8xf32> to vector<2x8xf32>
    %c0_13 = arith.constant 0 : index
    %c0_14 = arith.constant 0 : index
    %33 = vector.load %arg4[%c0_13, %c0_14] : memref<2x8xf32, #tpu.memory_space<vmem>>, vector<2x8xf32>
    tpu.vector_store %arg4[%c0_13, %c0_14], %32 {strides = array<i32>} : memref<2x8xf32, #tpu.memory_space<vmem>>, vector<2x8xf32>,
    %34 = vector.extract_strided_slice %31 {offsets = [2, 0], sizes = [2, 8], strides = [1, 1]} : vector<4x8xf32> to vector<2x8xf32>
    %c0_15 = arith.constant 0 : index
    %c0_16 = arith.constant 0 : index
    %35 = vector.load %arg5[%c0_15, %c0_16] : memref<2x8xf32, #tpu.memory_space<vmem>>, vector<2x8xf32>
    tpu.vector_store %arg5[%c0_15, %c0_16], %34 {strides = array<i32>} : memref<2x8xf32, #tpu.memory_space<vmem>>, vector<2x8xf32>,
    return
  }
  func.func @transform_0(%arg0: i32) -> (i32, i32) {
    %c0_i32 = arith.constant 0 : i32
    %c0_i32_0 = arith.constant 0 : i32
    %c0_i32_1 = arith.constant 0 : i32
    return %c0_i32, %c0_i32_0 : i32, i32
  }
  func.func @transform_1(%arg0: i32) -> (i32, i32) {
    %c0_i32 = arith.constant 0 : i32
    %c0_i32_0 = arith.constant 0 : i32
    %c0_i32_1 = arith.constant 0 : i32
    return %c0_i32, %c0_i32_0 : i32, i32
  }
  func.func @transform_2(%arg0: i32) -> (i32, i32) {
    %c0_i32 = arith.constant 0 : i32
    %c0_i32_0 = arith.constant 0 : i32
    return %c0_i32, %arg0 : i32, i32
  }
  func.func @transform_3(%arg0: i32) -> (i32, i32) {
    %c0_i32 = arith.constant 0 : i32
    %c0_i32_0 = arith.constant 0 : i32
    return %c0_i32, %arg0 : i32, i32
  }
  func.func @transform_4(%arg0: i32) -> (i32, i32) {
    %c0_i32 = arith.constant 0 : i32
    %c0_i32_0 = arith.constant 0 : i32
    return %c0_i32, %arg0 : i32, i32
  }
}

</mosaic_0001>

<llo_original>
// kernel: linear_regression_forward.1
$region0: #{linear_regression_forward.1}
  #allocation0 [shape = 'u32[]', space=smem, size = 0x4, offset = 0x4, fixed_abs, tag = 'smem constant byte address 0x4 - core index']
  #allocation1 [shape = 'u32[144,128]{1,0:T(1,128)}', space=vmem, size = 0x12000, scoped, tag = 'internal scratch']
  %s0 = inlined_call_operand.vmem [shape: f32[4,11], index: 0, kind: input, shape index: {}]
  %s1 = inlined_call_operand.vmem [shape: f32[4,1], index: 1, kind: input, shape index: {}]
  %s2 = inlined_call_operand.vmem [shape: f32[11,8], index: 2, kind: input, shape index: {}]
  %s3 = inlined_call_operand.hbm [shape: f32[2,8], index: 3, kind: output, shape index: {0}]
  %s4 = inlined_call_operand.hbm [shape: f32[2,8], index: 4, kind: output, shape index: {1}]
  %5 = xla_tuple %s3, %s4
  %s6 = sld [smem:[#allocation0]]
  $region30: #{linear_regression_forward.1} parent=0
    _
  %s8 = ssub.s32 1, %s6
  %s9 = scalar_select 0, %s8, %s6
  $region1: #{linear_regression_forward.1} parent=0
    #allocation2 [shape = 'u8[1024]{0}', space=vmem, size = 0x400, scoped, tag = 'output window, operand 0, single buffered']
    #allocation3 [shape = 's32[1]{0}', space=sflag, size = 0x4, scoped, tag = 'scoped memory for linear_regression_forward.1']
    #allocation4 [shape = 'u8[1024]{0}', space=vmem, size = 0x400, scoped, tag = 'output window, operand 1, single buffered']
    #allocation5 [shape = 's32[1]{0}', space=sflag, size = 0x4, scoped, tag = 'scoped memory for linear_regression_forward.1']
    %10 = vsyncpa [#allocation3], 0
    %11 = vsyncpa [#allocation5], 0
    // Predicated region
    $region2: #{linear_regression_forward.1} parent=1 // pred_check
      _
    $region3: #{linear_regression_forward.1} parent=1 // pred_check_branch
      %13 = sbr.rel (0) target = $region5
    $region4: #{linear_regression_forward.1} parent=1 // pred_region
      _
    $region5: #{linear_regression_forward.1} parent=1 // pred_fallthru
      _
    // Predicated region
    $region6: #{linear_regression_forward.1} parent=1 // pred_check
      _
    $region7: #{linear_regression_forward.1} parent=1 // pred_check_branch
      %15 = sbr.rel (0) target = $region9
    $region8: #{linear_regression_forward.1} parent=1 // pred_region
      _
    $region9: #{linear_regression_forward.1} parent=1 // pred_fallthru
      _
    // Predicated region
    $region10: #{linear_regression_forward.1} parent=1 // pred_check
      _
    $region11: #{linear_regression_forward.1} parent=1 // pred_check_branch
      %17 = sbr.rel (0) target = $region13
    $region12: #{linear_regression_forward.1} parent=1 // pred_region
      _
    $region13: #{linear_regression_forward.1} parent=1 // pred_fallthru
      _
    %v18 = vld [vmem:[%s0] sm:$0xf]
    %v19 = vld [vmem:[%s2] sm:$0xff]
    %v20 = vld [vmem:[%s2 + $0x8] sm:$0x7]
    %v21 = vld [vmem:[%s1] sm:$0xf]
    %23 = vset.pattern.permute.xlu0 0
    %24 = vperm.xlu0 %23, %v21
    %v25 = vpop.permute.xlu0 %24
    %vm27 = vcmask 89088
    %v29 = vsel %vm27, %v18, 0
    %vm31 = vcmask 1042432
    %v33 = vsel %vm31, %v20, 0
    %35 = vmatprep.subr.mxu0 0.0
    %36 = vmatpush1.msra.mxu0 %v19
    %37 = vmatprep.subr.mxu0 0.0
    %38 = vmatpush1.msra.mxu0 %v33
    %39 = vmatprep.subr.mxu0 0.0
    %40 = vmatpush1.msra.mxu0 0.0
    %41 = vmatprep.subr.mxu0 0.0
    %42 = vmatpush1.msra.mxu0 0.0
    %43 = vmatprep.subr.mxu0 0.0
    %44 = vmatpush1.msra.mxu0 0.0
    %45 = vmatprep.subr.mxu0 0.0
    %46 = vmatpush1.msra.mxu0 0.0
    %47 = vmatprep.subr.mxu0 0.0
    %48 = vmatpush1.msra.mxu0 0.0
    %49 = vmatprep.subr.mxu0 0.0
    %50 = vmatpush1.msra.mxu0 0.0
    %51 = vmatprep.subr.mxu0 0.0
    %52 = vmatpush1.msra.mxu0 0.0
    %53 = vmatprep.subr.mxu0 0.0
    %54 = vmatpush1.msra.mxu0 0.0
    %55 = vmatprep.subr.mxu0 0.0
    %56 = vmatpush1.msra.mxu0 0.0
    %57 = vmatprep.subr.mxu0 0.0
    %58 = vmatpush1.msra.mxu0 0.0
    %59 = vmatprep.subr.mxu0 0.0
    %60 = vmatpush1.msra.mxu0 0.0
    %61 = vmatprep.subr.mxu0 0.0
    %62 = vmatpush1.msra.mxu0 0.0
    %63 = vmatprep.subr.mxu0 0.0
    %64 = vmatpush1.msra.mxu0 0.0
    %65 = vmatprep.subr.mxu0 0.0
    %66 = vmatpush1.msra.mxu0 0.0
    %67 = vmatprep.subr.mxu0 0.0
    %68 = vmatpush1.msra.mxu0 0.0
    %69 = vmatprep.subr.mxu0 0.0
    %70 = vmatpush1.msra.mxu0 0.0
    %71 = vmatprep.subr.mxu0 0.0
    %72 = vmatpush1.msra.mxu0 0.0
    %73 = vmatprep.subr.mxu0 0.0
    %74 = vmatpush1.msra.mxu0 0.0
    %75 = vmatprep.subr.mxu0 0.0
    %76 = vmatpush1.msra.mxu0 0.0
    %77 = vmatprep.subr.mxu0 0.0
    %78 = vmatpush1.msra.mxu0 0.0
    %79 = vmatprep.subr.mxu0 0.0
    %80 = vmatpush1.msra.mxu0 0.0
    %81 = vmatprep.subr.mxu0 0.0
    %82 = vmatpush1.msra.mxu0 0.0
    %83 = vmatprep.subr.mxu0 0.0
    %84 = vmatpush1.msra.mxu0 0.0
    %85 = vmatprep.subr.mxu0 0.0
    %86 = vmatpush1.msra.mxu0 0.0
    %87 = vmatprep.subr.mxu0 0.0
    %88 = vmatpush1.msra.mxu0 0.0
    %89 = vmatprep.subr.mxu0 0.0
    %90 = vmatpush1.msra.mxu0 0.0
    %91 = vmatprep.subr.mxu0 0.0
    %92 = vmatpush1.msra.mxu0 0.0
    %93 = vmatprep.subr.mxu0 0.0
    %94 = vmatpush1.msra.mxu0 0.0
    %95 = vmatprep.subr.mxu0 0.0
    %96 = vmatpush1.msra.mxu0 0.0
    %97 = vmatprep.subr.mxu0 0.0
    %98 = vmatpush1.msra.mxu0 0.0
    %99 = vmatprep.mubr.f32.mxu0 0.0
    %100 = vmatmul.mubr.f32.gmra.mrb[0].mxu0 %v29
    %v101 = vpop.f32.mrb[0].mxu0
    %v102 = vadd.f32 %v25, %v101
    %v103 = vpop.f32.mrb[0].mxu0
    %104 = vdwg.mxu0
    %v105 = vxor.u32 %v102, 2147483648
    %v106 = vmul.f32 %v105, 1.442695
    %v107 = vpow.pop %v106
    %v108 = vadd.f32 %v107, 1.0
    %v109 = vrcp.pop %v108
    %v110 = vmul.f32 1.0, %v109
    %v111 = vlaneseq
    %v112 = vshrl.u32 %v111, 7
    %vm113 = vcmp.eq.s32.totalorder %v112, 0
    %vm114 = vcmp.eq.s32.totalorder %v112, 1
    %vm115 = vcmp.eq.s32.totalorder %v112, 2
    %v116 = vsel %vm115, 20.0, 10.0
    %v117 = vsel %vm114, 40.0, %v116
    %v118 = vsel %vm113, 280.0, %v117
    %v119 = vsel %vm113, 120.0, 0.0
    %v120 = vmul.f32 %v118, %v110
    %v121 = vadd.f32 %v120, %v119
    %vm122 = vcmask 58368
    %123 = vst.msk [vmem:[#allocation2] sm:$0x3] %vm122, %v121
    %vm124 = vcmask 60418
    %125 = vst.msk [vmem:[#allocation4 - $0x2] sm:$0xc] %vm124, %v121
    // Predicated region
    $region14: #{linear_regression_forward.1} parent=1 // pred_check
      _
    $region15: #{linear_regression_forward.1} parent=1 // pred_check_branch
      %127 = sbr.rel (0) target = $region17
    $region16: #{linear_regression_forward.1} parent=1 // pred_region
      %s129 = ssub.s32 32, 32
      %130 = vsyncadd [#allocation3], %s129
      %s132 = sshll.u32 [#allocation2], 4
      %s133 = int_to_ptr.vmem [resolvable:$true] %s132
      %135 = dma.vmem_to_hbm [thread:$0]  %s133, 32, %s3, [#allocation3]
    $region17: #{linear_regression_forward.1} parent=1 // pred_fallthru
      _
    // Predicated region
    $region18: #{linear_regression_forward.1} parent=1 // pred_check
      _
    $region19: #{linear_regression_forward.1} parent=1 // pred_check_branch
      %137 = sbr.rel (0) target = $region21
    $region20: #{linear_regression_forward.1} parent=1 // pred_region
      %s139 = ssub.s32 32, 32
      %140 = vsyncadd [#allocation5], %s139
      %s142 = sshll.u32 [#allocation4], 4
      %s143 = int_to_ptr.vmem [resolvable:$true] %s142
      %145 = dma.vmem_to_hbm [thread:$0]  %s143, 32, %s4, [#allocation5]
    $region21: #{linear_regression_forward.1} parent=1 // pred_fallthru
      _
    // Predicated region
    $region22: #{linear_regression_forward.1} parent=1 // pred_check
      _
    $region23: #{linear_regression_forward.1} parent=1 // pred_check_branch
      %147 = sbr.rel (0) target = $region25
    $region24: #{linear_regression_forward.1} parent=1 // pred_region
      %148 = dma.done [#allocation3], 32
    $region25: #{linear_regression_forward.1} parent=1 // pred_fallthru
      _
    // Predicated region
    $region26: #{linear_regression_forward.1} parent=1 // pred_check
      _
    $region27: #{linear_regression_forward.1} parent=1 // pred_check_branch
      %150 = sbr.rel (0) target = $region29
    $region28: #{linear_regression_forward.1} parent=1 // pred_region
      %151 = dma.done [#allocation5], 32
    $region29: #{linear_regression_forward.1} parent=1 // pred_fallthru
      _
    %152 = vsyncpa [#allocation3], 1
    %153 = vsyncpa [#allocation5], 1

</llo_original>
